<compile_context>
chip_gen: v7x
topology: tpu7x:2x2x1
jax: 0.10.0
libtpu: 0.0.40
codegen_flags: <defaults>
</compile_context>

<pallas_src>
import functools
import math

import jax
import jax.numpy as jnp
from jax.experimental import pallas as pl
from jax.experimental.pallas import tpu as pltpu


def set_layer_kernel(x_ref, wg_ref, wl_ref, bg_ref, o_ref, *, cb):
    # x_ref:  (TB, N, D_in)  TB set instances, full set of N elements each
    # wg_ref: (D_in, D_out)  Gamma weight (pre-transposed vs. PyTorch)
    # wl_ref: (D_in, D_out)  Lambda weight (pre-transposed, no bias)
    # bg_ref: (1, D_out)     Gamma bias (f32)
    # o_ref:  (TB, N, D_out)
    tb, n, d_in = x_ref.shape
    d_out = o_ref.shape[-1]
    num_chunks = tb // cb

    wg = wg_ref[...]
    # Tiny matrices: promote Lambda weight / bias to f32 once so the
    # correction matmul accumulates without double-rounding the mean.
    wl_f32 = wl_ref[...].astype(jnp.float32)
    bg = bg_ref[...].astype(jnp.float32)                          # (1, D_out)

    def process(lo):
        xc = x_ref[pl.ds(lo, cb)]                                 # (cb, N, D_in)
        # Exact per-instance set mean, f32 accumulation, no full f32 x copy.
        xm = jnp.mean(xc, axis=1, dtype=jnp.float32)              # (cb, D_in)
        # Per-instance correction: bg - Lambda(mean(x)).
        corr = bg - jnp.dot(xm, wl_f32,
                            preferred_element_type=jnp.float32)   # (cb, D_out)
        # Gamma over all cb*N rows in one MXU call.
        g = jnp.dot(xc.reshape(cb * n, d_in), wg,
                    preferred_element_type=jnp.float32)           # (cb*N, D_out)
        out = g.reshape(cb, n, d_out) + corr[:, None, :]
        o_ref[pl.ds(lo, cb)] = out.astype(o_ref.dtype)

    if num_chunks == 1:
        process(0)
    else:
        # Chunk over the TB dimension so f32 intermediates stay ~512 rows.
        def body(c, carry):
            process(pl.multiple_of(c * cb, cb))
            return carry

        jax.lax.fori_loop(0, num_chunks, body, 0)


def _generation_params():
    """VMEM budgets + TensorCore-count hint, branched on TPU generation."""
    vmem_cap = None
    try:
        info = pltpu.get_tpu_info()
        vmem_cap = int(getattr(info, "vmem_capacity_bytes", 0)) or None
    except Exception:
        vmem_cap = None
    if vmem_cap is None:
        # Unknown: be conservative (assume the smallest, v7x-class, VMEM).
        vmem_cap = 64 * 2**20
    if vmem_cap <= 64 * 2**20:
        # v7x-class: 64 MiB VMEM per TC, 2 TCs per chip -> leave headroom.
        return {"vmem_limit": 48 * 2**20, "block_budget": 14 * 2**20,
                "multi_tc": True}
    # v5e / v6e: 128 MiB VMEM, single TensorCore.
    return {"vmem_limit": 64 * 2**20, "block_budget": 24 * 2**20,
            "multi_tc": False}


def _choose_tb(b, n, d_in, d_out, in_isz, out_isz, *, block_budget_bytes,
               target_step_bytes=8 * 2**20, multi_tc=False):
    """Pick the batch-tile size TB (always a divisor of b)."""
    # HBM bytes moved per set instance per grid step (read x + write out).
    per_inst_bytes = n * (d_in * in_isz + d_out * out_isz)
    # Amortize the ~0.35 us per-step pipeline cost: multi-MiB steps.
    tb = max(1, target_step_bytes // max(per_inst_bytes, 1))
    # VMEM fit: double-buffered x/out blocks + small per-instance f32 scratch
    # (mean/correction), after reserving the single-buffered weights/bias.
    weight_bytes = 2 * d_in * d_out * in_isz + 4 * d_out
    budget = max(block_budget_bytes - weight_bytes, per_inst_bytes)
    per_tb_vmem = 2 * per_inst_bytes + 4 * (d_in + d_out)
    tb = min(tb, max(1, budget // per_tb_vmem))
    tb = int(min(tb, b))
    if multi_tc and b >= 2:
        # v7x: keep >=4 (or >=2) grid steps so both TensorCores stay busy.
        tb = min(tb, max(1, b // (4 if b >= 4 else 2)))
    # Round down to a divisor of b so blocks tile the batch exactly.
    while b % tb:
        tb -= 1
    if multi_tc and b % 2 == 0:
        # Prefer an even step count (balanced across the two TCs), but don't
        # shrink the block by more than 2x just for evenness.
        for t in range(tb, 0, -1):
            if b % t == 0 and (b // t) % 2 == 0:
                if 2 * t >= tb:
                    tb = t
                break
    return max(tb, 1)


def _choose_chunk(tb, n, target_rows=512):
    """Rows-per-MXU-call chunk; bounds in-kernel f32 intermediates."""
    cb = max(1, target_rows // max(n, 1))
    cb = min(cb, tb)
    while tb % cb:
        cb -= 1
    return cb


def set_layer(x, w_gamma, b_gamma, w_lambda, *, compute_dtype=None,
              out_dtype=None):
    """DeepSets SetLayer forward (reduction='mean', 1 FC layer, Gamma bias).

    x:        (B, N, D_in)
    w_gamma:  (D_in, D_out)  Gamma weight, pre-transposed vs. PyTorch layout
    b_gamma:  (D_out,) or (1, D_out)
    w_lambda: (D_in, D_out)  Lambda weight, pre-transposed, no bias
    compute_dtype: optional reduced precision (e.g. jnp.bfloat16) for the
        bandwidth-bound x / weight reads; accumulation stays f32. Recommended
        on all generations (v5e/v6e/v7x) since the kernel is HBM-bound.
    out_dtype: optional reduced-precision output (e.g. jnp.bfloat16) to halve
        the dominant output write stream; defaults to x.dtype.

    Note: correctness does not depend on N, but N being a multiple of the
    sublane tile (8 for f32, 16 for bf16) keeps the in-kernel flatten a pure
    layout no-op.
    """
    B, N, D_in = x.shape
    D_out = w_gamma.shape[1]
    out_dtype = x.dtype if out_dtype is None else jnp.dtype(out_dtype)

    b_gamma = jnp.reshape(b_gamma, (1, D_out)).astype(jnp.float32)

    if compute_dtype is not None:
        x_c = x.astype(compute_dtype)
        w_gamma = w_gamma.astype(compute_dtype)
        w_lambda = w_lambda.astype(compute_dtype)
    else:
        x_c = x

    gen = _generation_params()
    in_isz = jnp.dtype(x_c.dtype).itemsize
    out_isz = jnp.dtype(out_dtype).itemsize

    TB = _choose_tb(B, N, D_in, D_out, in_isz, out_isz,
                    block_budget_bytes=gen["block_budget"],
                    multi_tc=gen["multi_tc"])
    CB = _choose_chunk(TB, N)
    grid = (B // TB,)

    kernel = functools.partial(set_layer_kernel, cb=CB)

    def _call(single_buffer_weights):
        # Constant-index weight/bias inputs never get re-fetched; single-buffer
        # them to halve their VMEM footprint.
        wkw = {"pipeline_mode": pl.Buffered(1)} if single_buffer_weights else {}
        return pl.pallas_call(
            kernel,
            out_shape=jax.ShapeDtypeStruct((B, N, D_out), out_dtype),
            grid_spec=pltpu.PrefetchScalarGridSpec(
                num_scalar_prefetch=0,
                grid=grid,
                in_specs=[
                    pl.BlockSpec((TB, N, D_in), lambda b: (b, 0, 0)),
                    pl.BlockSpec((D_in, D_out), lambda b: (0, 0), **wkw),
                    pl.BlockSpec((D_in, D_out), lambda b: (0, 0), **wkw),
                    pl.BlockSpec((1, D_out), lambda b: (0, 0), **wkw),
                ],
                out_specs=pl.BlockSpec((TB, N, D_out), lambda b: (b, 0, 0)),
            ),
            compiler_params=pltpu.CompilerParams(
                dimension_semantics=("parallel",),
                vmem_limit_bytes=gen["vmem_limit"],
            ),
        )(x_c, w_gamma, w_lambda, b_gamma)

    try:
        return _call(True)
    except Exception:
        # Fallback for JAX versions that reject pl.Buffered(1) on a BlockSpec.
        return _call(False)


if __name__ == "__main__":
    # Small shapes consistent with the module: (batch, set size, features).
    B, N, D_in, D_out = 8, 16, 32, 32

    key = jax.random.PRNGKey(0)
    kx, kwg, kbg, kwl = jax.random.split(key, 4)

    x = jax.random.normal(kx, (B, N, D_in), dtype=jnp.float32)

    # nn.Linear-style deterministic init: uniform(-1/sqrt(fan_in), 1/sqrt(fan_in))
    bound = 1.0 / math.sqrt(D_in)
    w_gamma = jax.random.uniform(kwg, (D_in, D_out), jnp.float32, -bound, bound)
    b_gamma = jax.random.uniform(kbg, (D_out,), jnp.float32, -bound, bound)
    w_lambda = jax.random.uniform(kwl, (D_in, D_out), jnp.float32, -bound, bound)

    # Pure-JAX reference of the forward semantics.
    xm_ref = jnp.mean(x, axis=1, keepdims=True)
    ref = (x @ w_gamma + b_gamma) - (xm_ref @ w_lambda)

    # f32 path: exact (tight tolerance).
    out = jax.block_until_ready(set_layer(x, w_gamma, b_gamma, w_lambda))
    assert out.shape == (B, N, D_out)
    assert out.dtype == x.dtype
    assert jnp.allclose(out, ref, atol=1e-5, rtol=1e-5)

    # bf16 compute + bf16 output path (HBM-bytes optimization): looser tolerance.
    out_bf16 = jax.block_until_ready(
        set_layer(x, w_gamma, b_gamma, w_lambda,
                  compute_dtype=jnp.bfloat16, out_dtype=jnp.bfloat16))
    assert out_bf16.shape == (B, N, D_out)
    assert out_bf16.dtype == jnp.bfloat16
    assert jnp.allclose(out_bf16.astype(jnp.float32), ref, atol=5e-2, rtol=5e-2)

    print("KERNEL_OK")
</pallas_src>

<mosaic_0001>
module attributes {stable_mosaic.version = 11 : i64} {
  func.func @set_layer_kernel(%arg0: i32, %arg1: memref<2x16x32xf32, #tpu.memory_space<vmem>>, %arg2: memref<32x32xf32, #tpu.memory_space<vmem>>, %arg3: memref<32x32xf32, #tpu.memory_space<vmem>>, %arg4: memref<1x32xf32, #tpu.memory_space<vmem>>, %arg5: memref<2x16x32xf32, #tpu.memory_space<vmem>>) attributes {dimension_semantics = [#tpu.dimension_semantics<parallel>], iteration_bounds = array<i64: 4>, scalar_prefetch = 0 : i64, scratch_operands = 0 : i64, tpu.core_type = #tpu.core_type<tc>, window_params = [{transform_indices = @transform_0, window_bounds = array<i64: 2, 16, 32>}, {pipeline_mode = #tpu.pipeline_mode<synchronous>, transform_indices = @transform_1, window_bounds = array<i64: 32, 32>}, {pipeline_mode = #tpu.pipeline_mode<synchronous>, transform_indices = @transform_2, window_bounds = array<i64: 32, 32>}, {pipeline_mode = #tpu.pipeline_mode<synchronous>, transform_indices = @transform_3, window_bounds = array<i64: 1, 32>}, {transform_indices = @transform_4, window_bounds = array<i64: 2, 16, 32>}]} {
    %c0 = arith.constant 0 : index
    %c0_0 = arith.constant 0 : index
    %0 = vector.load %arg2[%c0, %c0_0] : memref<32x32xf32, #tpu.memory_space<vmem>>, vector<32x32xf32>
    %c0_1 = arith.constant 0 : index
    %c0_2 = arith.constant 0 : index
    %1 = vector.load %arg3[%c0_1, %c0_2] : memref<32x32xf32, #tpu.memory_space<vmem>>, vector<32x32xf32>
    %c0_3 = arith.constant 0 : index
    %c0_4 = arith.constant 0 : index
    %2 = vector.load %arg4[%c0_3, %c0_4] : memref<1x32xf32, #tpu.memory_space<vmem>>, vector<1x32xf32>
    %c0_5 = arith.constant 0 : index
    %c0_6 = arith.constant 0 : index
    %c0_7 = arith.constant 0 : index
    %3 = vector.load %arg1[%c0_5, %c0_6, %c0_7] : memref<2x16x32xf32, #tpu.memory_space<vmem>>, vector<2x16x32xf32>
    %cst = arith.constant dense<0.000000e+00> : vector<2x32xf32>
    %4 = vector.multi_reduction <add>, %3, %cst [1] : vector<2x16x32xf32> to vector<2x32xf32>
    %cst_8 = arith.constant 1.600000e+01 : f32
    %5 = vector.broadcast %cst_8 : f32 to vector<2x32xf32>
    %6 = arith.divf %4, %5 : vector<2x32xf32>
    %cst_9 = arith.constant dense<0.000000e+00> : vector<2x32xf32>
    %7 = tpu.matmul %6, %1, %cst_9 {dimension_numbers = #tpu.dot_dimension_numbers<[1], [0], [0], [1], [0, 0, 1, 1], [], []>} : vector<2x32xf32>, vector<32x32xf32>, vector<2x32xf32> -> vector<2x32xf32>
    %8 = vector.broadcast %2 : vector<1x32xf32> to vector<2x32xf32>
    %9 = arith.subf %8, %7 : vector<2x32xf32>
    %10 = vector.shape_cast %3 : vector<2x16x32xf32> to vector<32x32xf32>
    %cst_10 = arith.constant dense<0.000000e+00> : vector<32x32xf32>
    %11 = tpu.matmul %10, %0, %cst_10 {dimension_numbers = #tpu.dot_dimension_numbers<[1], [0], [0], [1], [0, 0, 1, 1], [], []>} : vector<32x32xf32>, vector<32x32xf32>, vector<32x32xf32> -> vector<32x32xf32>
    %12 = vector.shape_cast %11 : vector<32x32xf32> to vector<2x16x32xf32>
    %13 = vector.shape_cast %9 : vector<2x32xf32> to vector<2x1x32xf32>
    %14 = vector.broadcast %13 : vector<2x1x32xf32> to vector<2x16x32xf32>
    %15 = arith.addf %12, %14 : vector<2x16x32xf32>
    %c0_11 = arith.constant 0 : index
    %c0_12 = arith.constant 0 : index
    %c0_13 = arith.constant 0 : index
    %16 = vector.load %arg5[%c0_11, %c0_12, %c0_13] : memref<2x16x32xf32, #tpu.memory_space<vmem>>, vector<2x16x32xf32>
    tpu.vector_store %arg5[%c0_11, %c0_12, %c0_13], %15 {strides = array<i32>} : memref<2x16x32xf32, #tpu.memory_space<vmem>>, vector<2x16x32xf32>,
    return
  }
  func.func @transform_0(%arg0: i32) -> (i32, i32, i32) {
    %c0_i32 = arith.constant 0 : i32
    %c0_i32_0 = arith.constant 0 : i32
    %c0_i32_1 = arith.constant 0 : i32
    return %arg0, %c0_i32, %c0_i32_0 : i32, i32, i32
  }
  func.func @transform_1(%arg0: i32) -> (i32, i32) {
    %c0_i32 = arith.constant 0 : i32
    %c0_i32_0 = arith.constant 0 : i32
    %c0_i32_1 = arith.constant 0 : i32
    return %c0_i32, %c0_i32_0 : i32, i32
  }
  func.func @transform_2(%arg0: i32) -> (i32, i32) {
    %c0_i32 = arith.constant 0 : i32
    %c0_i32_0 = arith.constant 0 : i32
    %c0_i32_1 = arith.constant 0 : i32
    return %c0_i32, %c0_i32_0 : i32, i32
  }
  func.func @transform_3(%arg0: i32) -> (i32, i32) {
    %c0_i32 = arith.constant 0 : i32
    %c0_i32_0 = arith.constant 0 : i32
    %c0_i32_1 = arith.constant 0 : i32
    return %c0_i32, %c0_i32_0 : i32, i32
  }
  func.func @transform_4(%arg0: i32) -> (i32, i32, i32) {
    %c0_i32 = arith.constant 0 : i32
    %c0_i32_0 = arith.constant 0 : i32
    %c0_i32_1 = arith.constant 0 : i32
    return %arg0, %c0_i32, %c0_i32_0 : i32, i32, i32
  }
}

module attributes {stable_mosaic.version = 11 : i64} {
  func.func @set_layer_kernel(%arg0: i32, %arg1: memref<2x16x32xf32, #tpu.memory_space<vmem>>, %arg2: memref<32x32xf32, #tpu.memory_space<vmem>>, %arg3: memref<32x32xf32, #tpu.memory_space<vmem>>, %arg4: memref<1x32xf32, #tpu.memory_space<vmem>>, %arg5: memref<2x16x32xf32, #tpu.memory_space<vmem>>) attributes {dimension_semantics = [#tpu.dimension_semantics<parallel>], iteration_bounds = array<i64: 4>, scalar_prefetch = 0 : i64, scratch_operands = 0 : i64, tpu.core_type = #tpu.core_type<tc>, window_params = [{transform_indices = @transform_0, window_bounds = array<i64: 2, 16, 32>}, {pipeline_mode = #tpu.pipeline_mode<synchronous>, transform_indices = @transform_1, window_bounds = array<i64: 32, 32>}, {pipeline_mode = #tpu.pipeline_mode<synchronous>, transform_indices = @transform_2, window_bounds = array<i64: 32, 32>}, {pipeline_mode = #tpu.pipeline_mode<synchronous>, transform_indices = @transform_3, window_bounds = array<i64: 1, 32>}, {transform_indices = @transform_4, window_bounds = array<i64: 2, 16, 32>}]} {
    %c0 = arith.constant 0 : index
    %c0_0 = arith.constant 0 : index
    %0 = vector.load %arg2[%c0, %c0_0] : memref<32x32xf32, #tpu.memory_space<vmem>>, vector<32x32xf32>
    %c0_1 = arith.constant 0 : index
    %c0_2 = arith.constant 0 : index
    %1 = vector.load %arg3[%c0_1, %c0_2] : memref<32x32xf32, #tpu.memory_space<vmem>>, vector<32x32xf32>
    %c0_3 = arith.constant 0 : index
    %c0_4 = arith.constant 0 : index
    %2 = vector.load %arg4[%c0_3, %c0_4] : memref<1x32xf32, #tpu.memory_space<vmem>>, vector<1x32xf32>
    %c0_5 = arith.constant 0 : index
    %c0_6 = arith.constant 0 : index
    %c0_7 = arith.constant 0 : index
    %3 = vector.load %arg1[%c0_5, %c0_6, %c0_7] : memref<2x16x32xf32, #tpu.memory_space<vmem>>, vector<2x16x32xf32>
    %cst = arith.constant dense<0.000000e+00> : vector<2x32xf32>
    %4 = vector.multi_reduction <add>, %3, %cst [1] : vector<2x16x32xf32> to vector<2x32xf32>
    %cst_8 = arith.constant 1.600000e+01 : f32
    %5 = vector.broadcast %cst_8 : f32 to vector<2x32xf32>
    %6 = arith.divf %4, %5 : vector<2x32xf32>
    %cst_9 = arith.constant dense<0.000000e+00> : vector<2x32xf32>
    %7 = tpu.matmul %6, %1, %cst_9 {dimension_numbers = #tpu.dot_dimension_numbers<[1], [0], [0], [1], [0, 0, 1, 1], [], []>} : vector<2x32xf32>, vector<32x32xf32>, vector<2x32xf32> -> vector<2x32xf32>
    %8 = vector.broadcast %2 : vector<1x32xf32> to vector<2x32xf32>
    %9 = arith.subf %8, %7 : vector<2x32xf32>
    %10 = vector.shape_cast %3 : vector<2x16x32xf32> to vector<32x32xf32>
    %cst_10 = arith.constant dense<0.000000e+00> : vector<32x32xf32>
    %11 = tpu.matmul %10, %0, %cst_10 {dimension_numbers = #tpu.dot_dimension_numbers<[1], [0], [0], [1], [0, 0, 1, 1], [], []>} : vector<32x32xf32>, vector<32x32xf32>, vector<32x32xf32> -> vector<32x32xf32>
    %12 = vector.shape_cast %11 : vector<32x32xf32> to vector<2x16x32xf32>
    %13 = vector.shape_cast %9 : vector<2x32xf32> to vector<2x1x32xf32>
    %14 = vector.broadcast %13 : vector<2x1x32xf32> to vector<2x16x32xf32>
    %15 = arith.addf %12, %14 : vector<2x16x32xf32>
    %c0_11 = arith.constant 0 : index
    %c0_12 = arith.constant 0 : index
    %c0_13 = arith.constant 0 : index
    %16 = vector.load %arg5[%c0_11, %c0_12, %c0_13] : memref<2x16x32xf32, #tpu.memory_space<vmem>>, vector<2x16x32xf32>
    tpu.vector_store %arg5[%c0_11, %c0_12, %c0_13], %15 {strides = array<i32>} : memref<2x16x32xf32, #tpu.memory_space<vmem>>, vector<2x16x32xf32>,
    return
  }
  func.func @transform_0(%arg0: i32) -> (i32, i32, i32) {
    %c0_i32 = arith.constant 0 : i32
    %c0_i32_0 = arith.constant 0 : i32
    %c0_i32_1 = arith.constant 0 : i32
    return %arg0, %c0_i32, %c0_i32_0 : i32, i32, i32
  }
  func.func @transform_1(%arg0: i32) -> (i32, i32) {
    %c0_i32 = arith.constant 0 : i32
    %c0_i32_0 = arith.constant 0 : i32
    %c0_i32_1 = arith.constant 0 : i32
    return %c0_i32, %c0_i32_0 : i32, i32
  }
  func.func @transform_2(%arg0: i32) -> (i32, i32) {
    %c0_i32 = arith.constant 0 : i32
    %c0_i32_0 = arith.constant 0 : i32
    %c0_i32_1 = arith.constant 0 : i32
    return %c0_i32, %c0_i32_0 : i32, i32
  }
  func.func @transform_3(%arg0: i32) -> (i32, i32) {
    %c0_i32 = arith.constant 0 : i32
    %c0_i32_0 = arith.constant 0 : i32
    %c0_i32_1 = arith.constant 0 : i32
    return %c0_i32, %c0_i32_0 : i32, i32
  }
  func.func @transform_4(%arg0: i32) -> (i32, i32, i32) {
    %c0_i32 = arith.constant 0 : i32
    %c0_i32_0 = arith.constant 0 : i32
    %c0_i32_1 = arith.constant 0 : i32
    return %arg0, %c0_i32, %c0_i32_0 : i32, i32, i32
  }
}

</mosaic_0001>

<llo_original>
// kernel: tpu_custom_call.1
$region0: #{tpu_custom_call.1}
  #allocation0 [shape = 'u32[]', space=smem, size = 0x4, offset = 0x4, fixed_abs, tag = 'smem constant byte address 0x4 - core index']
  #allocation1 [shape = 'u32[144,128]{1,0:T(1,128)}', space=vmem, size = 0x12000, scoped, tag = 'internal scratch']
  %s0 = inlined_call_operand.hbm [shape: f32[8,16,32], index: 0, kind: input, shape index: {}]
  %s1 = inlined_call_operand.hbm [shape: f32[32,32], index: 1, kind: input, shape index: {}]
  %s2 = inlined_call_operand.hbm [shape: f32[32,32], index: 2, kind: input, shape index: {}]
  %s3 = inlined_call_operand.vmem [shape: f32[1,32], index: 3, kind: input, shape index: {}]
  %s4 = inlined_call_operand.hbm [shape: f32[8,16,32], index: 4, kind: output, shape index: {}]
  %s5 = sld [smem:[#allocation0]]
  $region61: #{tpu_custom_call.1} parent=0
    _
  %s7 = ssub.s32 1, %s5
  %s8 = scalar_select 0, %s7, %s5
  $region1: #{tpu_custom_call.1} parent=0
    #allocation2 [shape = 'u8[32768]{0}', space=vmem, size = 0x8000, scoped, tag = 'input window, operand 0']
    #allocation3 [shape = 's32[2]{0}', space=sflag, size = 0x8, scoped, tag = 'scoped memory for tpu_custom_call.1']
    #allocation4 [shape = 's32[2]{0}', space=sflag, size = 0x8, scoped, tag = 'scoped memory for tpu_custom_call.1']
    #allocation5 [shape = 'u8[16384]{0}', space=vmem, size = 0x4000, scoped, tag = 'input window, operand 1, single buffered']
    #allocation6 [shape = 's32[1]{0}', space=sflag, size = 0x4, scoped, tag = 'scoped memory for tpu_custom_call.1']
    #allocation7 [shape = 'u8[16384]{0}', space=vmem, size = 0x4000, scoped, tag = 'input window, operand 2, single buffered']
    #allocation8 [shape = 'u8[32768]{0}', space=vmem, size = 0x8000, scoped, tag = 'output window, operand 0']
    %9 = vsyncpa [#allocation3], 0
    %s10 = scalar_lea.sflag [#allocation3], 1
    %11 = vsyncpa %s10, 0
    %12 = vsyncpa [#allocation6], 0
    %13 = vsyncpa [#allocation4], 0
    %s14 = scalar_lea.sflag [#allocation4], 1
    %15 = vsyncpa %s14, 0
    loop: start=0, step=1, limit=6
    $region2: #{tpu_custom_call.1} parent=1 // loop_pre_header
      _
    $region3: #{tpu_custom_call.1} parent=1 // loop_header
      %s17 = sphi 0, %s21
      %p18 = scmp.ge.s32.totalorder %s17, 6
      %s27 = sphi 0, %s29
      %s30 = sphi 0, %s27
      %s31 = sphi 0, %s30
      %s47 = sphi 0, %s31
      %s51 = sphi 0, %s51
      %s53 = sphi 0, %s51
      %s54 = sphi 0, %s53
      %s68 = sphi 0, %s54
      %s72 = sphi 0, %s72
      %s74 = sphi 0, %s72
      %s75 = sphi 0, %s74
      %s89 = sphi 0, %s75
      %s93 = sphi 0, %s93
      %s95 = sphi 0, %s93
      %s96 = sphi 0, %s95
      %s110 = sphi 0, %s96
      %s116 = sphi 0, %s118
      %s119 = sphi 0, %s116
      %s120 = sphi 0, %s119
      %s136 = sphi 0, %s120
    $region4: #{tpu_custom_call.1} parent=1 // loop_header_branch
      %20 = sbr.rel (%p18) target = $region8
    $region5: #{tpu_custom_call.1} parent=1 // loop_body
      %s22 = ssub.s32 %s17, 1
      %s23 = ssub.s32 %s17, 2
      %s24 = sadd.s32 %s17, 1
      %s25 = ssub.s32 %s17, %s24
      %p26 = scmp.eq.s32.totalorder %s25, 0
      %s28 = sadd.s32 %s27, 1
      %s29 = scalar_select %p26, %s27, %s28
      %p32 = pneg %p26
      %p33 = scmp.eq.s32.totalorder %s17, 3
      %p34 = por %p32, %p33
      %p35 = scmp.ne.s32.totalorder %s27, %s30
      %p36 = scmp.eq.s32.totalorder %s17, 0
      %p37 = por %p35, %p36
      %p38 = scmp.ne.s32.totalorder %s27, %s30
      %p39 = scmp.eq.s32.totalorder %s22, 3
      %p40 = por %p38, %p39
      %p41 = scmp.ne.s32.totalorder %s30, %s31
      %p42 = scmp.eq.s32.totalorder %s22, 0
      %p43 = por %p41, %p42
      %p44 = scmp.ne.s32.totalorder %s30, %s31
      %p45 = scmp.eq.s32.totalorder %s23, 3
      %p46 = por %p44, %p45
      %p48 = scmp.ne.s32.totalorder %s31, %s47
      %p49 = scmp.eq.s32.totalorder %s23, 0
      %p50 = por %p48, %p49
      %s52 = sadd.s32 %s51, 1
      %p55 = scmp.eq.s32.totalorder %s17, 3
      %p56 = scmp.ne.s32.totalorder %s51, %s53
      %p57 = scmp.eq.s32.totalorder %s17, 0
      %p58 = por %p56, %p57
      %p59 = scmp.ne.s32.totalorder %s51, %s53
      %p60 = scmp.eq.s32.totalorder %s22, 3
      %p61 = por %p59, %p60
      %p62 = scmp.ne.s32.totalorder %s53, %s54
      %p63 = scmp.eq.s32.totalorder %s22, 0
      %p64 = por %p62, %p63
      %p65 = scmp.ne.s32.totalorder %s53, %s54
      %p66 = scmp.eq.s32.totalorder %s23, 3
      %p67 = por %p65, %p66
      %p69 = scmp.ne.s32.totalorder %s54, %s68
      %p70 = scmp.eq.s32.totalorder %s23, 0
      %p71 = por %p69, %p70
      %s73 = sadd.s32 %s72, 1
      %p76 = scmp.eq.s32.totalorder %s17, 3
      %p77 = scmp.ne.s32.totalorder %s72, %s74
      %p78 = scmp.eq.s32.totalorder %s17, 0
      %p79 = por %p77, %p78
      %p80 = scmp.ne.s32.totalorder %s72, %s74
      %p81 = scmp.eq.s32.totalorder %s22, 3
      %p82 = por %p80, %p81
      %p83 = scmp.ne.s32.totalorder %s74, %s75
      %p84 = scmp.eq.s32.totalorder %s22, 0
      %p85 = por %p83, %p84
      %p86 = scmp.ne.s32.totalorder %s74, %s75
      %p87 = scmp.eq.s32.totalorder %s23, 3
      %p88 = por %p86, %p87
      %p90 = scmp.ne.s32.totalorder %s75, %s89
      %p91 = scmp.eq.s32.totalorder %s23, 0
      %p92 = por %p90, %p91
      %s94 = sadd.s32 %s93, 1
      %p97 = scmp.eq.s32.totalorder %s17, 3
      %p98 = scmp.ne.s32.totalorder %s93, %s95
      %p99 = scmp.eq.s32.totalorder %s17, 0
      %p100 = por %p98, %p99
      %p101 = scmp.ne.s32.totalorder %s93, %s95
      %p102 = scmp.eq.s32.totalorder %s22, 3
      %p103 = por %p101, %p102
      %p104 = scmp.ne.s32.totalorder %s95, %s96
      %p105 = scmp.eq.s32.totalorder %s22, 0
      %p106 = por %p104, %p105
      %p107 = scmp.ne.s32.totalorder %s95, %s96
      %p108 = scmp.eq.s32.totalorder %s23, 3
      %p109 = por %p107, %p108
      %p111 = scmp.ne.s32.totalorder %s96, %s110
      %p112 = scmp.eq.s32.totalorder %s23, 0
      %p113 = por %p111, %p112
      %s114 = ssub.s32 %s17, %s24
      %p115 = scmp.eq.s32.totalorder %s114, 0
      %s117 = sadd.s32 %s116, 1
      %s118 = scalar_select %p115, %s116, %s117
      %p121 = pneg %p115
      %p122 = scmp.eq.s32.totalorder %s17, 3
      %p123 = por %p121, %p122
      %p124 = scmp.ne.s32.totalorder %s116, %s119
      %p125 = scmp.eq.s32.totalorder %s17, 0
      %p126 = por %p124, %p125
      %p127 = scmp.ne.s32.totalorder %s116, %s119
      %p128 = scmp.eq.s32.totalorder %s22, 3
      %p129 = por %p127, %p128
      %p130 = scmp.ne.s32.totalorder %s119, %s120
      %p131 = scmp.eq.s32.totalorder %s22, 0
      %p132 = por %p130, %p131
      %p133 = scmp.ne.s32.totalorder %s119, %s120
      %p134 = scmp.eq.s32.totalorder %s23, 3
      %p135 = por %p133, %p134
      %p137 = scmp.ne.s32.totalorder %s120, %s136
      %p138 = scmp.eq.s32.totalorder %s23, 0
      %p139 = por %p137, %p138
      %p140 = scmp.le.s32.totalorder 1, %s17
      %p141 = scmp.lt.s32.totalorder %s17, 5
      %p142 = pnand %p140, %p141
      %p143 = pneg %p142
      // Predicated region
      $region9: #{tpu_custom_call.1} parent=5 // pred_check
        _
      $region10: #{tpu_custom_call.1} parent=5 // pred_check_branch
        %145 = sbr.rel (%p142) target = $region12
      $region11: #{tpu_custom_call.1} parent=5 // pred_region
        %s146 = ssub.s32 %s17, 1
        // Predicated region
        $region13: #{tpu_custom_call.1} parent=11 // pred_check
          %p147 = pneg %p64
        $region14: #{tpu_custom_call.1} parent=11 // pred_check_branch
          %149 = sbr.rel (%p147) target = $region16
        $region15: #{tpu_custom_call.1} parent=11 // pred_region
          %s151 = ssub.s32 512, 512
          %152 = vsyncadd [#allocation6], %s151
          %s153 = sshll.u32 [#allocation5], 4
          %s154 = int_to_ptr.vmem [resolvable:$true] %s153
          %159 = dma.hbm_to_vmem [thread:$0]  %s1, 512, %s154, [#allocation6], 128, 128, 8
        $region16: #{tpu_custom_call.1} parent=11 // pred_fallthru
          _
        // Predicated region
        $region17: #{tpu_custom_call.1} parent=11 // pred_check
          %p160 = pneg %p85
        $region18: #{tpu_custom_call.1} parent=11 // pred_check_branch
          %162 = sbr.rel (%p160) target = $region20
        $region19: #{tpu_custom_call.1} parent=11 // pred_region
          %s164 = ssub.s32 512, 512
          %165 = vsyncadd [#allocation6], %s164
          %s166 = sshll.u32 [#allocation7], 4
          %s167 = int_to_ptr.vmem [resolvable:$true] %s166
          %172 = dma.hbm_to_vmem [thread:$0]  %s2, 512, %s167, [#allocation6], 128, 128, 8
        $region20: #{tpu_custom_call.1} parent=11 // pred_fallthru
          _
        // Predicated region
        $region21: #{tpu_custom_call.1} parent=11 // pred_check
          %p173 = pneg %p106
        $region22: #{tpu_custom_call.1} parent=11 // pred_check_branch
          %175 = sbr.rel (%p173) target = $region24
        $region23: #{tpu_custom_call.1} parent=11 // pred_region
          _
        $region24: #{tpu_custom_call.1} parent=11 // pred_fallthru
          _
      $region12: #{tpu_custom_call.1} parent=5 // pred_fallthru
        _
      %p176 = scmp.lt.s32.totalorder %s17, 4
      // Predicated region
      $region25: #{tpu_custom_call.1} parent=5 // pred_check
        %p177 = pneg %p176
      $region26: #{tpu_custom_call.1} parent=5 // pred_check_branch
        %179 = sbr.rel (%p177) target = $region28
      $region27: #{tpu_custom_call.1} parent=5 // pred_region
        // Predicated region
        $region29: #{tpu_custom_call.1} parent=27 // pred_check
          %p180 = pneg %p37
        $region30: #{tpu_custom_call.1} parent=27 // pred_check_branch
          %182 = sbr.rel (%p180) target = $region32
        $region31: #{tpu_custom_call.1} parent=27 // pred_region
          %s183 = sand.u32 %s27, 1
          %s184 = scalar_lea.sflag [#allocation3], %s183
          %s185 = sand.u32 %s27, 1
          %s186 = smul.addr %s185, 32
          %s187 = scalar_lea.vmem [#allocation2], %s186
          %s188 = smul.u32 2, %s17
          %s190 = ssub.s32 512, 512
          %191 = vsyncadd %s184, %s190
          %s192 = smul.addr %s188, 2
          %s193 = smul.addr %s192, 128
          %s194 = scalar_lea.hbm %s0, %s193
          %s195 = sshll.u32 %s187, 4
          %s196 = int_to_ptr.vmem [resolvable:$true] %s195
          %201 = dma.hbm_to_vmem [thread:$0]  %s194, 512, %s196, %s184, 128, 128, 8
        $region32: #{tpu_custom_call.1} parent=27 // pred_fallthru
          _
      $region28: #{tpu_custom_call.1} parent=5 // pred_fallthru
        _
      %p202 = scmp.le.s32.totalorder 1, %s17
      %p203 = scmp.lt.s32.totalorder %s17, 5
      %p204 = pnand %p202, %p203
      %p205 = pneg %p204
      // Predicated region
      $region33: #{tpu_custom_call.1} parent=5 // pred_check
        _
      $region34: #{tpu_custom_call.1} parent=5 // pred_check_branch
        %207 = sbr.rel (%p204) target = $region36
      $region35: #{tpu_custom_call.1} parent=5 // pred_region
        %s208 = ssub.s32 %s17, 1
        %s209 = sand.u32 %s30, 1
        %s210 = scalar_lea.sflag [#allocation3], %s209
        %s211 = sand.u32 %s30, 1
        %s212 = smul.addr %s211, 32
        %s213 = scalar_lea.vmem [#allocation2], %s212
        // Predicated region
        $region37: #{tpu_custom_call.1} parent=35 // pred_check
          %p214 = pneg %p43
        $region38: #{tpu_custom_call.1} parent=35 // pred_check_branch
          %216 = sbr.rel (%p214) target = $region40
        $region39: #{tpu_custom_call.1} parent=35 // pred_region
          %217 = dma.done %s210, 512
        $region40: #{tpu_custom_call.1} parent=35 // pred_fallthru
          _
        // Predicated region
        $region41: #{tpu_custom_call.1} parent=35 // pred_check
          %p218 = pneg %p64
        $region42: #{tpu_custom_call.1} parent=35 // pred_check_branch
          %220 = sbr.rel (%p218) target = $region44
        $region43: #{tpu_custom_call.1} parent=35 // pred_region
          %221 = dma.done [#allocation6], 512
        $region44: #{tpu_custom_call.1} parent=35 // pred_fallthru
          _
        // Predicated region
        $region45: #{tpu_custom_call.1} parent=35 // pred_check
          %p222 = pneg %p85
        $region46: #{tpu_custom_call.1} parent=35 // pred_check_branch
          %224 = sbr.rel (%p222) target = $region48
        $region47: #{tpu_custom_call.1} parent=35 // pred_region
          %225 = dma.done [#allocation6], 512
        $region48: #{tpu_custom_call.1} parent=35 // pred_fallthru
          _
        %s226 = sand.u32 %s30, 1
        %s227 = scalar_lea.sflag [#allocation3], %s226
        %s228 = sand.u32 %s30, 1
        %s229 = smul.addr %s228, 32
        %s230 = scalar_lea.vmem [#allocation2], %s229
        %p231 = pneg %p43
        %p232 = pneg %p40
        %p233 = pneg %p64
        %p234 = pneg %p61
        %p235 = pneg %p85
        %p236 = pneg %p82
        %p237 = pneg %p106
        %p238 = pneg %p103
        %p239 = pneg %p132
        %p240 = pneg %p129
        %s241 = sand.u32 %s119, 1
        %s242 = scalar_lea.sflag [#allocation4], %s241
        %s243 = sand.u32 %s119, 1
        %s244 = smul.addr %s243, 32
        %s245 = scalar_lea.vmem [#allocation8], %s244
        %s246 = smul.u32 2, %s22
        %s247 = smul.u32 2, %s22
        %v248 = vld [vmem:[#allocation5] sm:$0xff]
        %v249 = vld [vmem:[#allocation5 + $0x8] sm:$0xff]
        %v250 = vld [vmem:[#allocation5 + $0x10] sm:$0xff]
        %v251 = vld [vmem:[#allocation5 + $0x18] sm:$0xff]
        %v252 = vld [vmem:[#allocation7] sm:$0xff]
        %v253 = vld [vmem:[#allocation7 + $0x8] sm:$0xff]
        %v254 = vld [vmem:[#allocation7 + $0x10] sm:$0xff]
        %v255 = vld [vmem:[#allocation7 + $0x18] sm:$0xff]
        %v256 = vld [vmem:[%s3] sm:$0x1]
        %v257 = vld [vmem:[%s213] sm:$0xff]
        %v258 = vld [vmem:[%s213 + $0x8] sm:$0xff]
        %v259 = vld [vmem:[%s213 + $0x10] sm:$0xff]
        %v260 = vld [vmem:[%s213 + $0x18] sm:$0xff]
        %vm261 = vcmask 261120
        %v262 = vsel %vm261, %v257, 0.0
        %v263 = vsel %vm261, %v258, 0.0
        %v264 = vadd.f32 %v262, %v263
        %v265 = vrot.slane %v264, 4
        %v266 = vadd.f32 %v264, %v265
        %v267 = vrot.slane %v266, 2
        %v268 = vadd.f32 %v266, %v267
        %v269 = vrot.slane %v268, 1
        %v270 = vadd.f32 %v268, %v269
        %v271 = vsel %vm261, %v259, 0.0
        %v272 = vsel %vm261, %v260, 0.0
        %v273 = vadd.f32 %v271, %v272
        %v274 = vrot.slane %v273, 4
        %v275 = vadd.f32 %v273, %v274
        %v276 = vrot.slane %v275, 2
        %v277 = vadd.f32 %v275, %v276
        %v278 = vrot.slane %v277, 1
        %v279 = vadd.f32 %v277, %v278
        %v280 = vrcp.pop 16.0
        %v281 = vmul.f32 %v270, %v280
        %v282 = vmul.f32 %v279, %v280
        %vm285 = vcmask 1041409
        %v286 = vsel %vm285, %v282, %v281
        %v287 = vsel %vm261, %v286, 0
        %289 = vmatprep.subr.mxu0 0.0
        %290 = vmatpush1.msra.mxu0 %v252
        %291 = vmatprep.subr.mxu0 0.0
        %292 = vmatpush1.msra.mxu0 %v253
        %293 = vmatprep.subr.mxu0 0.0
        %294 = vmatpush1.msra.mxu0 %v254
        %295 = vmatprep.subr.mxu0 0.0
        %296 = vmatpush1.msra.mxu0 %v255
        %297 = vmatprep.subr.mxu0 0.0
        %298 = vmatpush1.msra.mxu0 0.0
        %299 = vmatprep.subr.mxu0 0.0
        %300 = vmatpush1.msra.mxu0 0.0
        %301 = vmatprep.subr.mxu0 0.0
        %302 = vmatpush1.msra.mxu0 0.0
        %303 = vmatprep.subr.mxu0 0.0
        %304 = vmatpush1.msra.mxu0 0.0
        %305 = vmatprep.subr.mxu0 0.0
        %306 = vmatpush1.msra.mxu0 0.0
        %307 = vmatprep.subr.mxu0 0.0
        %308 = vmatpush1.msra.mxu0 0.0
        %309 = vmatprep.subr.mxu0 0.0
        %310 = vmatpush1.msra.mxu0 0.0
        %311 = vmatprep.subr.mxu0 0.0
        %312 = vmatpush1.msra.mxu0 0.0
        %313 = vmatprep.subr.mxu0 0.0
        %314 = vmatpush1.msra.mxu0 0.0
        %315 = vmatprep.subr.mxu0 0.0
        %316 = vmatpush1.msra.mxu0 0.0
        %317 = vmatprep.subr.mxu0 0.0
        %318 = vmatpush1.msra.mxu0 0.0
        %319 = vmatprep.subr.mxu0 0.0
        %320 = vmatpush1.msra.mxu0 0.0
        %321 = vmatprep.subr.mxu0 0.0
        %322 = vmatpush1.msra.mxu0 0.0
        %323 = vmatprep.subr.mxu0 0.0
        %324 = vmatpush1.msra.mxu0 0.0
        %325 = vmatprep.subr.mxu0 0.0
        %326 = vmatpush1.msra.mxu0 0.0
        %327 = vmatprep.subr.mxu0 0.0
        %328 = vmatpush1.msra.mxu0 0.0
        %329 = vmatprep.subr.mxu0 0.0
        %330 = vmatpush1.msra.mxu0 0.0
        %331 = vmatprep.subr.mxu0 0.0
        %332 = vmatpush1.msra.mxu0 0.0
        %333 = vmatprep.subr.mxu0 0.0
        %334 = vmatpush1.msra.mxu0 0.0
        %335 = vmatprep.subr.mxu0 0.0
        %336 = vmatpush1.msra.mxu0 0.0
        %337 = vmatprep.subr.mxu0 0.0
        %338 = vmatpush1.msra.mxu0 0.0
        %339 = vmatprep.subr.mxu0 0.0
        %340 = vmatpush1.msra.mxu0 0.0
        %341 = vmatprep.subr.mxu0 0.0
        %342 = vmatpush1.msra.mxu0 0.0
        %343 = vmatprep.subr.mxu0 0.0
        %344 = vmatpush1.msra.mxu0 0.0
        %345 = vmatprep.subr.mxu0 0.0
        %346 = vmatpush1.msra.mxu0 0.0
        %347 = vmatprep.subr.mxu0 0.0
        %348 = vmatpush1.msra.mxu0 0.0
        %349 = vmatprep.subr.mxu0 0.0
        %350 = vmatpush1.msra.mxu0 0.0
        %351 = vmatprep.subr.mxu0 0.0
        %352 = vmatpush1.msra.mxu0 0.0
        %353 = vmatprep.mubr.f32.mxu0 0.0
        %354 = vmatmul.mubr.f32.gmra.mrb[0].mxu0 %v287
        %v355 = vpop.f32.mrb[0].mxu0
        %v356 = vadd.f32 0.0, %v355
        %v357 = vpop.f32.mrb[0].mxu0
        %358 = vdwg.mxu0
        %v360 = vlaneseq
        %v361 = vshrl.u32 %v360, 7
        %v362 = vsub.s32 0, %v361
        %v363 = vrot.slane %v256, %v362
        %v365 = vsub.f32 %v363, %v356
        %v367 = vsel %vm261, %v257, 0
        %v370 = vsel %vm261, %v258, 0
        %v373 = vsel %vm261, %v259, 0
        %v376 = vsel %vm261, %v260, 0
        %378 = vmatprep.subr.mxu0 0.0
        %379 = vmatpush1.msra.mxu0 %v248
        %380 = vmatprep.subr.mxu0 0.0
        %381 = vmatpush1.msra.mxu0 %v249
        %382 = vmatprep.subr.mxu0 0.0
        %383 = vmatpush1.msra.mxu0 %v250
        %384 = vmatprep.subr.mxu0 0.0
        %385 = vmatpush1.msra.mxu0 %v251
        %386 = vmatprep.subr.mxu0 0.0
        %387 = vmatpush1.msra.mxu0 0.0
        %388 = vmatprep.subr.mxu0 0.0
        %389 = vmatpush1.msra.mxu0 0.0
        %390 = vmatprep.subr.mxu0 0.0
        %391 = vmatpush1.msra.mxu0 0.0
        %392 = vmatprep.subr.mxu0 0.0
        %393 = vmatpush1.msra.mxu0 0.0
        %394 = vmatprep.subr.mxu0 0.0
        %395 = vmatpush1.msra.mxu0 0.0
        %396 = vmatprep.subr.mxu0 0.0
        %397 = vmatpush1.msra.mxu0 0.0
        %398 = vmatprep.subr.mxu0 0.0
        %399 = vmatpush1.msra.mxu0 0.0
        %400 = vmatprep.subr.mxu0 0.0
        %401 = vmatpush1.msra.mxu0 0.0
        %402 = vmatprep.subr.mxu0 0.0
        %403 = vmatpush1.msra.mxu0 0.0
        %404 = vmatprep.subr.mxu0 0.0
        %405 = vmatpush1.msra.mxu0 0.0
        %406 = vmatprep.subr.mxu0 0.0
        %407 = vmatpush1.msra.mxu0 0.0
        %408 = vmatprep.subr.mxu0 0.0
        %409 = vmatpush1.msra.mxu0 0.0
        %410 = vmatprep.subr.mxu0 0.0
        %411 = vmatpush1.msra.mxu0 0.0
        %412 = vmatprep.subr.mxu0 0.0
        %413 = vmatpush1.msra.mxu0 0.0
        %414 = vmatprep.subr.mxu0 0.0
        %415 = vmatpush1.msra.mxu0 0.0
        %416 = vmatprep.subr.mxu0 0.0
        %417 = vmatpush1.msra.mxu0 0.0
        %418 = vmatprep.subr.mxu0 0.0
        %419 = vmatpush1.msra.mxu0 0.0
        %420 = vmatprep.subr.mxu0 0.0
        %421 = vmatpush1.msra.mxu0 0.0
        %422 = vmatprep.subr.mxu0 0.0
        %423 = vmatpush1.msra.mxu0 0.0
        %424 = vmatprep.subr.mxu0 0.0
        %425 = vmatpush1.msra.mxu0 0.0
        %426 = vmatprep.subr.mxu0 0.0
        %427 = vmatpush1.msra.mxu0 0.0
        %428 = vmatprep.subr.mxu0 0.0
        %429 = vmatpush1.msra.mxu0 0.0
        %430 = vmatprep.subr.mxu0 0.0
        %431 = vmatpush1.msra.mxu0 0.0
        %432 = vmatprep.subr.mxu0 0.0
        %433 = vmatpush1.msra.mxu0 0.0
        %434 = vmatprep.subr.mxu0 0.0
        %435 = vmatpush1.msra.mxu0 0.0
        %436 = vmatprep.subr.mxu0 0.0
        %437 = vmatpush1.msra.mxu0 0.0
        %438 = vmatprep.subr.mxu0 0.0
        %439 = vmatpush1.msra.mxu0 0.0
        %440 = vmatprep.subr.mxu0 0.0
        %441 = vmatpush1.msra.mxu0 0.0
        %442 = vmatprep.mubr.f32.mxu0 0.0
        %443 = vmatmul.mubr.f32.gmra.mrb[0].mxu0 %v367
        %v444 = vpop.f32.mrb[0].mxu0
        %v445 = vadd.f32 0.0, %v444
        %v446 = vpop.f32.mrb[0].mxu0
        %447 = vmatprep.mubr.f32.mxu0 0.0
        %448 = vmatmul.mubr.f32.gmra.mrb[0].mxu0 %v370
        %v449 = vpop.f32.mrb[0].mxu0
        %v450 = vadd.f32 0.0, %v449
        %v451 = vpop.f32.mrb[0].mxu0
        %452 = vmatprep.mubr.f32.mxu0 0.0
        %453 = vmatmul.mubr.f32.gmra.mrb[0].mxu0 %v373
        %v454 = vpop.f32.mrb[0].mxu0
        %v455 = vadd.f32 0.0, %v454
        %v456 = vpop.f32.mrb[0].mxu0
        %457 = vmatprep.mubr.f32.mxu0 0.0
        %458 = vmatmul.mubr.f32.gmra.mrb[0].mxu0 %v376
        %v459 = vpop.f32.mrb[0].mxu0
        %v460 = vadd.f32 0.0, %v459
        %v461 = vpop.f32.mrb[0].mxu0
        %462 = vdwg.mxu0
        %v465 = vunpack.c.l.s4 1966171168
        %v466 = vunpack.c.0.s8 %v465
        %v467 = vlaneseq
        %v468 = vshrl.u32 %v467, 7
        %v469 = vsub.s32 %v466, %v468
        %v470 = vrot.slane %v365, %v469
        %v471 = vcombine.high %v470, %v470
        %v473 = vunpack.c.l.s4 1966171168
        %v474 = vunpack.c.0.s8 %v473
        %v475 = vlaneseq
        %v476 = vshrl.u32 %v475, 7
        %v477 = vsub.s32 %v474, %v476
        %v478 = vrot.slane %v470, %v477
        %v480 = vunpack.c.l.s4 1966171168
        %v481 = vunpack.c.0.s8 %v480
        %v482 = vlaneseq
        %v483 = vshrl.u32 %v482, 7
        %v484 = vsub.s32 %v481, %v483
        %v485 = vrot.slane %v471, %v484
        %v486 = vlaneseq
        %v487 = vshrl.u32 %v486, 7
        %v488 = vsub.s32 0, %v487
        %v489 = vrot.slane %v478, %v488
        %v490 = vlaneseq
        %v491 = vshrl.u32 %v490, 7
        %v492 = vsub.s32 0, %v491
        %v493 = vrot.slane %v485, %v492
        %v496 = vadd.f32 %v445, %v489
        %v497 = vadd.f32 %v450, %v489
        %v498 = vadd.f32 %v455, %v493
        %v499 = vadd.f32 %v460, %v493
        %500 = vst.msk [vmem:[%s245] sm:$0xff] %vm261, %v496
        %501 = vst.msk [vmem:[%s245 + $0x8] sm:$0xff] %vm261, %v497
        %502 = vst.msk [vmem:[%s245 + $0x10] sm:$0xff] %vm261, %v498
        %503 = vst.msk [vmem:[%s245 + $0x18] sm:$0xff] %vm261, %v499
        %s504 = sand.u32 %s119, 1
        %s505 = scalar_lea.sflag [#allocation4], %s504
        %s506 = sand.u32 %s119, 1
        %s507 = smul.addr %s506, 32
        %s508 = scalar_lea.vmem [#allocation8], %s507
        // Predicated region
        $region49: #{tpu_custom_call.1} parent=35 // pred_check
          %p509 = pneg %p129
        $region50: #{tpu_custom_call.1} parent=35 // pred_check_branch
          %511 = sbr.rel (%p509) target = $region52
        $region51: #{tpu_custom_call.1} parent=35 // pred_region
          %s512 = smul.u32 2, %s22
          %s514 = ssub.s32 512, 512
          %515 = vsyncadd %s505, %s514
          %s516 = smul.addr %s512, 2
          %s517 = smul.addr %s516, 128
          %s518 = scalar_lea.hbm %s4, %s517
          %s519 = sshll.u32 %s508, 4
          %s520 = int_to_ptr.vmem [resolvable:$true] %s519
          %525 = dma.vmem_to_hbm [thread:$0]  %s520, 512, %s518, %s505, 128, 128, 8
        $region52: #{tpu_custom_call.1} parent=35 // pred_fallthru
          _
      $region36: #{tpu_custom_call.1} parent=5 // pred_fallthru
        _
      %p526 = scmp.le.s32.totalorder 2, %s17
      // Predicated region
      $region53: #{tpu_custom_call.1} parent=5 // pred_check
        %p527 = pneg %p526
      $region54: #{tpu_custom_call.1} parent=5 // pred_check_branch
        %529 = sbr.rel (%p527) target = $region56
      $region55: #{tpu_custom_call.1} parent=5 // pred_region
        %s530 = ssub.s32 %s17, 2
        // Predicated region
        $region57: #{tpu_custom_call.1} parent=55 // pred_check
          %p531 = pneg %p135
        $region58: #{tpu_custom_call.1} parent=55 // pred_check_branch
          %533 = sbr.rel (%p531) target = $region60
        $region59: #{tpu_custom_call.1} parent=55 // pred_region
          %s534 = sand.u32 %s120, 1
          %s535 = scalar_lea.sflag [#allocation4], %s534
          %s536 = sand.u32 %s120, 1
          %s537 = smul.addr %s536, 32
          %s538 = scalar_lea.vmem [#allocation8], %s537
          %539 = dma.done %s535, 512
        $region60: #{tpu_custom_call.1} parent=55 // pred_fallthru
          _
      $region56: #{tpu_custom_call.1} parent=5 // pred_fallthru
        _
    $region6: #{tpu_custom_call.1} parent=1 // loop_footer
      %s21 = sadd.s32 1, %s17
    $region7: #{tpu_custom_call.1} parent=1 // loop_footer_branch
      %16 = sbr.rel target = $region3
    $region8: #{tpu_custom_call.1} parent=1 // loop_exit
      _
    %540 = vsyncpa [#allocation3], 1
    %s541 = scalar_lea.sflag [#allocation3], 1
    %542 = vsyncpa %s541, 1
    %543 = vsyncpa [#allocation6], 1
    %544 = vsyncpa [#allocation4], 1
    %s545 = scalar_lea.sflag [#allocation4], 1
    %546 = vsyncpa %s545, 1

// kernel: tpu_custom_call.1
$region0: #{tpu_custom_call.1}
  #allocation0 [shape = 'u32[]', space=smem, size = 0x4, offset = 0x4, fixed_abs, tag = 'smem constant byte address 0x4 - core index']
  #allocation1 [shape = 'u32[144,128]{1,0:T(1,128)}', space=vmem, size = 0x12000, scoped, tag = 'internal scratch']
  %s0 = inlined_call_operand.hbm [shape: f32[8,16,32], index: 0, kind: input, shape index: {}]
  %s1 = inlined_call_operand.hbm [shape: f32[32,32], index: 1, kind: input, shape index: {}]
  %s2 = inlined_call_operand.hbm [shape: f32[32,32], index: 2, kind: input, shape index: {}]
  %s3 = inlined_call_operand.vmem [shape: f32[1,32], index: 3, kind: input, shape index: {}]
  %s4 = inlined_call_operand.hbm [shape: f32[8,16,32], index: 4, kind: output, shape index: {}]
  %s5 = sld [smem:[#allocation0]]
  $region61: #{tpu_custom_call.1} parent=0
    _
  %s7 = ssub.s32 1, %s5
  %s8 = scalar_select 0, %s7, %s5
  $region1: #{tpu_custom_call.1} parent=0
    #allocation2 [shape = 'u8[32768]{0}', space=vmem, size = 0x8000, scoped, tag = 'input window, operand 0']
    #allocation3 [shape = 's32[2]{0}', space=sflag, size = 0x8, scoped, tag = 'scoped memory for tpu_custom_call.1']
    #allocation4 [shape = 's32[2]{0}', space=sflag, size = 0x8, scoped, tag = 'scoped memory for tpu_custom_call.1']
    #allocation5 [shape = 'u8[16384]{0}', space=vmem, size = 0x4000, scoped, tag = 'input window, operand 1, single buffered']
    #allocation6 [shape = 's32[1]{0}', space=sflag, size = 0x4, scoped, tag = 'scoped memory for tpu_custom_call.1']
    #allocation7 [shape = 'u8[16384]{0}', space=vmem, size = 0x4000, scoped, tag = 'input window, operand 2, single buffered']
    #allocation8 [shape = 'u8[32768]{0}', space=vmem, size = 0x8000, scoped, tag = 'output window, operand 0']
    %9 = vsyncpa [#allocation3], 0
    %s10 = scalar_lea.sflag [#allocation3], 1
    %11 = vsyncpa %s10, 0
    %12 = vsyncpa [#allocation6], 0
    %13 = vsyncpa [#allocation4], 0
    %s14 = scalar_lea.sflag [#allocation4], 1
    %15 = vsyncpa %s14, 0
    loop: start=0, step=1, limit=6
    $region2: #{tpu_custom_call.1} parent=1 // loop_pre_header
      _
    $region3: #{tpu_custom_call.1} parent=1 // loop_header
      %s17 = sphi 0, %s21
      %p18 = scmp.ge.s32.totalorder %s17, 6
      %s27 = sphi 0, %s29
      %s30 = sphi 0, %s27
      %s31 = sphi 0, %s30
      %s47 = sphi 0, %s31
      %s51 = sphi 0, %s51
      %s53 = sphi 0, %s51
      %s54 = sphi 0, %s53
      %s68 = sphi 0, %s54
      %s72 = sphi 0, %s72
      %s74 = sphi 0, %s72
      %s75 = sphi 0, %s74
      %s89 = sphi 0, %s75
      %s93 = sphi 0, %s93
      %s95 = sphi 0, %s93
      %s96 = sphi 0, %s95
      %s110 = sphi 0, %s96
      %s116 = sphi 0, %s118
      %s119 = sphi 0, %s116
      %s120 = sphi 0, %s119
      %s136 = sphi 0, %s120
    $region4: #{tpu_custom_call.1} parent=1 // loop_header_branch
      %20 = sbr.rel (%p18) target = $region8
    $region5: #{tpu_custom_call.1} parent=1 // loop_body
      %s22 = ssub.s32 %s17, 1
      %s23 = ssub.s32 %s17, 2
      %s24 = sadd.s32 %s17, 1
      %s25 = ssub.s32 %s17, %s24
      %p26 = scmp.eq.s32.totalorder %s25, 0
      %s28 = sadd.s32 %s27, 1
      %s29 = scalar_select %p26, %s27, %s28
      %p32 = pneg %p26
      %p33 = scmp.eq.s32.totalorder %s17, 3
      %p34 = por %p32, %p33
      %p35 = scmp.ne.s32.totalorder %s27, %s30
      %p36 = scmp.eq.s32.totalorder %s17, 0
      %p37 = por %p35, %p36
      %p38 = scmp.ne.s32.totalorder %s27, %s30
      %p39 = scmp.eq.s32.totalorder %s22, 3
      %p40 = por %p38, %p39
      %p41 = scmp.ne.s32.totalorder %s30, %s31
      %p42 = scmp.eq.s32.totalorder %s22, 0
      %p43 = por %p41, %p42
      %p44 = scmp.ne.s32.totalorder %s30, %s31
      %p45 = scmp.eq.s32.totalorder %s23, 3
      %p46 = por %p44, %p45
      %p48 = scmp.ne.s32.totalorder %s31, %s47
      %p49 = scmp.eq.s32.totalorder %s23, 0
      %p50 = por %p48, %p49
      %s52 = sadd.s32 %s51, 1
      %p55 = scmp.eq.s32.totalorder %s17, 3
      %p56 = scmp.ne.s32.totalorder %s51, %s53
      %p57 = scmp.eq.s32.totalorder %s17, 0
      %p58 = por %p56, %p57
      %p59 = scmp.ne.s32.totalorder %s51, %s53
      %p60 = scmp.eq.s32.totalorder %s22, 3
      %p61 = por %p59, %p60
      %p62 = scmp.ne.s32.totalorder %s53, %s54
      %p63 = scmp.eq.s32.totalorder %s22, 0
      %p64 = por %p62, %p63
      %p65 = scmp.ne.s32.totalorder %s53, %s54
      %p66 = scmp.eq.s32.totalorder %s23, 3
      %p67 = por %p65, %p66
      %p69 = scmp.ne.s32.totalorder %s54, %s68
      %p70 = scmp.eq.s32.totalorder %s23, 0
      %p71 = por %p69, %p70
      %s73 = sadd.s32 %s72, 1
      %p76 = scmp.eq.s32.totalorder %s17, 3
      %p77 = scmp.ne.s32.totalorder %s72, %s74
      %p78 = scmp.eq.s32.totalorder %s17, 0
      %p79 = por %p77, %p78
      %p80 = scmp.ne.s32.totalorder %s72, %s74
      %p81 = scmp.eq.s32.totalorder %s22, 3
      %p82 = por %p80, %p81
      %p83 = scmp.ne.s32.totalorder %s74, %s75
      %p84 = scmp.eq.s32.totalorder %s22, 0
      %p85 = por %p83, %p84
      %p86 = scmp.ne.s32.totalorder %s74, %s75
      %p87 = scmp.eq.s32.totalorder %s23, 3
      %p88 = por %p86, %p87
      %p90 = scmp.ne.s32.totalorder %s75, %s89
      %p91 = scmp.eq.s32.totalorder %s23, 0
      %p92 = por %p90, %p91
      %s94 = sadd.s32 %s93, 1
      %p97 = scmp.eq.s32.totalorder %s17, 3
      %p98 = scmp.ne.s32.totalorder %s93, %s95
      %p99 = scmp.eq.s32.totalorder %s17, 0
      %p100 = por %p98, %p99
      %p101 = scmp.ne.s32.totalorder %s93, %s95
      %p102 = scmp.eq.s32.totalorder %s22, 3
      %p103 = por %p101, %p102
      %p104 = scmp.ne.s32.totalorder %s95, %s96
      %p105 = scmp.eq.s32.totalorder %s22, 0
      %p106 = por %p104, %p105
      %p107 = scmp.ne.s32.totalorder %s95, %s96
      %p108 = scmp.eq.s32.totalorder %s23, 3
      %p109 = por %p107, %p108
      %p111 = scmp.ne.s32.totalorder %s96, %s110
      %p112 = scmp.eq.s32.totalorder %s23, 0
      %p113 = por %p111, %p112
      %s114 = ssub.s32 %s17, %s24
      %p115 = scmp.eq.s32.totalorder %s114, 0
      %s117 = sadd.s32 %s116, 1
      %s118 = scalar_select %p115, %s116, %s117
      %p121 = pneg %p115
      %p122 = scmp.eq.s32.totalorder %s17, 3
      %p123 = por %p121, %p122
      %p124 = scmp.ne.s32.totalorder %s116, %s119
      %p125 = scmp.eq.s32.totalorder %s17, 0
      %p126 = por %p124, %p125
      %p127 = scmp.ne.s32.totalorder %s116, %s119
      %p128 = scmp.eq.s32.totalorder %s22, 3
      %p129 = por %p127, %p128
      %p130 = scmp.ne.s32.totalorder %s119, %s120
      %p131 = scmp.eq.s32.totalorder %s22, 0
      %p132 = por %p130, %p131
      %p133 = scmp.ne.s32.totalorder %s119, %s120
      %p134 = scmp.eq.s32.totalorder %s23, 3
      %p135 = por %p133, %p134
      %p137 = scmp.ne.s32.totalorder %s120, %s136
      %p138 = scmp.eq.s32.totalorder %s23, 0
      %p139 = por %p137, %p138
      %p140 = scmp.le.s32.totalorder 1, %s17
      %p141 = scmp.lt.s32.totalorder %s17, 5
      %p142 = pnand %p140, %p141
      %p143 = pneg %p142
      // Predicated region
      $region9: #{tpu_custom_call.1} parent=5 // pred_check
        _
      $region10: #{tpu_custom_call.1} parent=5 // pred_check_branch
        %145 = sbr.rel (%p142) target = $region12
      $region11: #{tpu_custom_call.1} parent=5 // pred_region
        %s146 = ssub.s32 %s17, 1
        // Predicated region
        $region13: #{tpu_custom_call.1} parent=11 // pred_check
          %p147 = pneg %p64
        $region14: #{tpu_custom_call.1} parent=11 // pred_check_branch
          %149 = sbr.rel (%p147) target = $region16
        $region15: #{tpu_custom_call.1} parent=11 // pred_region
          %s151 = ssub.s32 512, 512
          %152 = vsyncadd [#allocation6], %s151
          %s153 = sshll.u32 [#allocation5], 4
          %s154 = int_to_ptr.vmem [resolvable:$true] %s153
          %159 = dma.hbm_to_vmem [thread:$0]  %s1, 512, %s154, [#allocation6], 128, 128, 8
        $region16: #{tpu_custom_call.1} parent=11 // pred_fallthru
          _
        // Predicated region
        $region17: #{tpu_custom_call.1} parent=11 // pred_check
          %p160 = pneg %p85
        $region18: #{tpu_custom_call.1} parent=11 // pred_check_branch
          %162 = sbr.rel (%p160) target = $region20
        $region19: #{tpu_custom_call.1} parent=11 // pred_region
          %s164 = ssub.s32 512, 512
          %165 = vsyncadd [#allocation6], %s164
          %s166 = sshll.u32 [#allocation7], 4
          %s167 = int_to_ptr.vmem [resolvable:$true] %s166
          %172 = dma.hbm_to_vmem [thread:$0]  %s2, 512, %s167, [#allocation6], 128, 128, 8
        $region20: #{tpu_custom_call.1} parent=11 // pred_fallthru
          _
        // Predicated region
        $region21: #{tpu_custom_call.1} parent=11 // pred_check
          %p173 = pneg %p106
        $region22: #{tpu_custom_call.1} parent=11 // pred_check_branch
          %175 = sbr.rel (%p173) target = $region24
        $region23: #{tpu_custom_call.1} parent=11 // pred_region
          _
        $region24: #{tpu_custom_call.1} parent=11 // pred_fallthru
          _
      $region12: #{tpu_custom_call.1} parent=5 // pred_fallthru
        _
      %p176 = scmp.lt.s32.totalorder %s17, 4
      // Predicated region
      $region25: #{tpu_custom_call.1} parent=5 // pred_check
        %p177 = pneg %p176
      $region26: #{tpu_custom_call.1} parent=5 // pred_check_branch
        %179 = sbr.rel (%p177) target = $region28
      $region27: #{tpu_custom_call.1} parent=5 // pred_region
        // Predicated region
        $region29: #{tpu_custom_call.1} parent=27 // pred_check
          %p180 = pneg %p37
        $region30: #{tpu_custom_call.1} parent=27 // pred_check_branch
          %182 = sbr.rel (%p180) target = $region32
        $region31: #{tpu_custom_call.1} parent=27 // pred_region
          %s183 = sand.u32 %s27, 1
          %s184 = scalar_lea.sflag [#allocation3], %s183
          %s185 = sand.u32 %s27, 1
          %s186 = smul.addr %s185, 32
          %s187 = scalar_lea.vmem [#allocation2], %s186
          %s188 = smul.u32 2, %s17
          %s190 = ssub.s32 512, 512
          %191 = vsyncadd %s184, %s190
          %s192 = smul.addr %s188, 2
          %s193 = smul.addr %s192, 128
          %s194 = scalar_lea.hbm %s0, %s193
          %s195 = sshll.u32 %s187, 4
          %s196 = int_to_ptr.vmem [resolvable:$true] %s195
          %201 = dma.hbm_to_vmem [thread:$0]  %s194, 512, %s196, %s184, 128, 128, 8
        $region32: #{tpu_custom_call.1} parent=27 // pred_fallthru
          _
      $region28: #{tpu_custom_call.1} parent=5 // pred_fallthru
        _
      %p202 = scmp.le.s32.totalorder 1, %s17
      %p203 = scmp.lt.s32.totalorder %s17, 5
      %p204 = pnand %p202, %p203
      %p205 = pneg %p204
      // Predicated region
      $region33: #{tpu_custom_call.1} parent=5 // pred_check
        _
      $region34: #{tpu_custom_call.1} parent=5 // pred_check_branch
        %207 = sbr.rel (%p204) target = $region36
      $region35: #{tpu_custom_call.1} parent=5 // pred_region
        %s208 = ssub.s32 %s17, 1
        %s209 = sand.u32 %s30, 1
        %s210 = scalar_lea.sflag [#allocation3], %s209
        %s211 = sand.u32 %s30, 1
        %s212 = smul.addr %s211, 32
        %s213 = scalar_lea.vmem [#allocation2], %s212
        // Predicated region
        $region37: #{tpu_custom_call.1} parent=35 // pred_check
          %p214 = pneg %p43
        $region38: #{tpu_custom_call.1} parent=35 // pred_check_branch
          %216 = sbr.rel (%p214) target = $region40
        $region39: #{tpu_custom_call.1} parent=35 // pred_region
          %217 = dma.done %s210, 512
        $region40: #{tpu_custom_call.1} parent=35 // pred_fallthru
          _
        // Predicated region
        $region41: #{tpu_custom_call.1} parent=35 // pred_check
          %p218 = pneg %p64
        $region42: #{tpu_custom_call.1} parent=35 // pred_check_branch
          %220 = sbr.rel (%p218) target = $region44
        $region43: #{tpu_custom_call.1} parent=35 // pred_region
          %221 = dma.done [#allocation6], 512
        $region44: #{tpu_custom_call.1} parent=35 // pred_fallthru
          _
        // Predicated region
        $region45: #{tpu_custom_call.1} parent=35 // pred_check
          %p222 = pneg %p85
        $region46: #{tpu_custom_call.1} parent=35 // pred_check_branch
          %224 = sbr.rel (%p222) target = $region48
        $region47: #{tpu_custom_call.1} parent=35 // pred_region
          %225 = dma.done [#allocation6], 512
        $region48: #{tpu_custom_call.1} parent=35 // pred_fallthru
          _
        %s226 = sand.u32 %s30, 1
        %s227 = scalar_lea.sflag [#allocation3], %s226
        %s228 = sand.u32 %s30, 1
        %s229 = smul.addr %s228, 32
        %s230 = scalar_lea.vmem [#allocation2], %s229
        %p231 = pneg %p43
        %p232 = pneg %p40
        %p233 = pneg %p64
        %p234 = pneg %p61
        %p235 = pneg %p85
        %p236 = pneg %p82
        %p237 = pneg %p106
        %p238 = pneg %p103
        %p239 = pneg %p132
        %p240 = pneg %p129
        %s241 = sand.u32 %s119, 1
        %s242 = scalar_lea.sflag [#allocation4], %s241
        %s243 = sand.u32 %s119, 1
        %s244 = smul.addr %s243, 32
        %s245 = scalar_lea.vmem [#allocation8], %s244
        %s246 = smul.u32 2, %s22
        %s247 = smul.u32 2, %s22
        %v248 = vld [vmem:[#allocation5] sm:$0xff]
        %v249 = vld [vmem:[#allocation5 + $0x8] sm:$0xff]
        %v250 = vld [vmem:[#allocation5 + $0x10] sm:$0xff]
        %v251 = vld [vmem:[#allocation5 + $0x18] sm:$0xff]
        %v252 = vld [vmem:[#allocation7] sm:$0xff]
        %v253 = vld [vmem:[#allocation7 + $0x8] sm:$0xff]
        %v254 = vld [vmem:[#allocation7 + $0x10] sm:$0xff]
        %v255 = vld [vmem:[#allocation7 + $0x18] sm:$0xff]
        %v256 = vld [vmem:[%s3] sm:$0x1]
        %v257 = vld [vmem:[%s213] sm:$0xff]
        %v258 = vld [vmem:[%s213 + $0x8] sm:$0xff]
        %v259 = vld [vmem:[%s213 + $0x10] sm:$0xff]
        %v260 = vld [vmem:[%s213 + $0x18] sm:$0xff]
        %vm261 = vcmask 261120
        %v262 = vsel %vm261, %v257, 0.0
        %v263 = vsel %vm261, %v258, 0.0
        %v264 = vadd.f32 %v262, %v263
        %v265 = vrot.slane %v264, 4
        %v266 = vadd.f32 %v264, %v265
        %v267 = vrot.slane %v266, 2
        %v268 = vadd.f32 %v266, %v267
        %v269 = vrot.slane %v268, 1
        %v270 = vadd.f32 %v268, %v269
        %v271 = vsel %vm261, %v259, 0.0
        %v272 = vsel %vm261, %v260, 0.0
        %v273 = vadd.f32 %v271, %v272
        %v274 = vrot.slane %v273, 4
        %v275 = vadd.f32 %v273, %v274
        %v276 = vrot.slane %v275, 2
        %v277 = vadd.f32 %v275, %v276
        %v278 = vrot.slane %v277, 1
        %v279 = vadd.f32 %v277, %v278
        %v280 = vrcp.pop 16.0
        %v281 = vmul.f32 %v270, %v280
        %v282 = vmul.f32 %v279, %v280
        %vm285 = vcmask 1041409
        %v286 = vsel %vm285, %v282, %v281
        %v287 = vsel %vm261, %v286, 0
        %289 = vmatprep.subr.mxu0 0.0
        %290 = vmatpush1.msra.mxu0 %v252
        %291 = vmatprep.subr.mxu0 0.0
        %292 = vmatpush1.msra.mxu0 %v253
        %293 = vmatprep.subr.mxu0 0.0
        %294 = vmatpush1.msra.mxu0 %v254
        %295 = vmatprep.subr.mxu0 0.0
        %296 = vmatpush1.msra.mxu0 %v255
        %297 = vmatprep.subr.mxu0 0.0
        %298 = vmatpush1.msra.mxu0 0.0
        %299 = vmatprep.subr.mxu0 0.0
        %300 = vmatpush1.msra.mxu0 0.0
        %301 = vmatprep.subr.mxu0 0.0
        %302 = vmatpush1.msra.mxu0 0.0
        %303 = vmatprep.subr.mxu0 0.0
        %304 = vmatpush1.msra.mxu0 0.0
        %305 = vmatprep.subr.mxu0 0.0
        %306 = vmatpush1.msra.mxu0 0.0
        %307 = vmatprep.subr.mxu0 0.0
        %308 = vmatpush1.msra.mxu0 0.0
        %309 = vmatprep.subr.mxu0 0.0
        %310 = vmatpush1.msra.mxu0 0.0
        %311 = vmatprep.subr.mxu0 0.0
        %312 = vmatpush1.msra.mxu0 0.0
        %313 = vmatprep.subr.mxu0 0.0
        %314 = vmatpush1.msra.mxu0 0.0
        %315 = vmatprep.subr.mxu0 0.0
        %316 = vmatpush1.msra.mxu0 0.0
        %317 = vmatprep.subr.mxu0 0.0
        %318 = vmatpush1.msra.mxu0 0.0
        %319 = vmatprep.subr.mxu0 0.0
        %320 = vmatpush1.msra.mxu0 0.0
        %321 = vmatprep.subr.mxu0 0.0
        %322 = vmatpush1.msra.mxu0 0.0
        %323 = vmatprep.subr.mxu0 0.0
        %324 = vmatpush1.msra.mxu0 0.0
        %325 = vmatprep.subr.mxu0 0.0
        %326 = vmatpush1.msra.mxu0 0.0
        %327 = vmatprep.subr.mxu0 0.0
        %328 = vmatpush1.msra.mxu0 0.0
        %329 = vmatprep.subr.mxu0 0.0
        %330 = vmatpush1.msra.mxu0 0.0
        %331 = vmatprep.subr.mxu0 0.0
        %332 = vmatpush1.msra.mxu0 0.0
        %333 = vmatprep.subr.mxu0 0.0
        %334 = vmatpush1.msra.mxu0 0.0
        %335 = vmatprep.subr.mxu0 0.0
        %336 = vmatpush1.msra.mxu0 0.0
        %337 = vmatprep.subr.mxu0 0.0
        %338 = vmatpush1.msra.mxu0 0.0
        %339 = vmatprep.subr.mxu0 0.0
        %340 = vmatpush1.msra.mxu0 0.0
        %341 = vmatprep.subr.mxu0 0.0
        %342 = vmatpush1.msra.mxu0 0.0
        %343 = vmatprep.subr.mxu0 0.0
        %344 = vmatpush1.msra.mxu0 0.0
        %345 = vmatprep.subr.mxu0 0.0
        %346 = vmatpush1.msra.mxu0 0.0
        %347 = vmatprep.subr.mxu0 0.0
        %348 = vmatpush1.msra.mxu0 0.0
        %349 = vmatprep.subr.mxu0 0.0
        %350 = vmatpush1.msra.mxu0 0.0
        %351 = vmatprep.subr.mxu0 0.0
        %352 = vmatpush1.msra.mxu0 0.0
        %353 = vmatprep.mubr.f32.mxu0 0.0
        %354 = vmatmul.mubr.f32.gmra.mrb[0].mxu0 %v287
        %v355 = vpop.f32.mrb[0].mxu0
        %v356 = vadd.f32 0.0, %v355
        %v357 = vpop.f32.mrb[0].mxu0
        %358 = vdwg.mxu0
        %v360 = vlaneseq
        %v361 = vshrl.u32 %v360, 7
        %v362 = vsub.s32 0, %v361
        %v363 = vrot.slane %v256, %v362
        %v365 = vsub.f32 %v363, %v356
        %v367 = vsel %vm261, %v257, 0
        %v370 = vsel %vm261, %v258, 0
        %v373 = vsel %vm261, %v259, 0
        %v376 = vsel %vm261, %v260, 0
        %378 = vmatprep.subr.mxu0 0.0
        %379 = vmatpush1.msra.mxu0 %v248
        %380 = vmatprep.subr.mxu0 0.0
        %381 = vmatpush1.msra.mxu0 %v249
        %382 = vmatprep.subr.mxu0 0.0
        %383 = vmatpush1.msra.mxu0 %v250
        %384 = vmatprep.subr.mxu0 0.0
        %385 = vmatpush1.msra.mxu0 %v251
        %386 = vmatprep.subr.mxu0 0.0
        %387 = vmatpush1.msra.mxu0 0.0
        %388 = vmatprep.subr.mxu0 0.0
        %389 = vmatpush1.msra.mxu0 0.0
        %390 = vmatprep.subr.mxu0 0.0
        %391 = vmatpush1.msra.mxu0 0.0
        %392 = vmatprep.subr.mxu0 0.0
        %393 = vmatpush1.msra.mxu0 0.0
        %394 = vmatprep.subr.mxu0 0.0
        %395 = vmatpush1.msra.mxu0 0.0
        %396 = vmatprep.subr.mxu0 0.0
        %397 = vmatpush1.msra.mxu0 0.0
        %398 = vmatprep.subr.mxu0 0.0
        %399 = vmatpush1.msra.mxu0 0.0
        %400 = vmatprep.subr.mxu0 0.0
        %401 = vmatpush1.msra.mxu0 0.0
        %402 = vmatprep.subr.mxu0 0.0
        %403 = vmatpush1.msra.mxu0 0.0
        %404 = vmatprep.subr.mxu0 0.0
        %405 = vmatpush1.msra.mxu0 0.0
        %406 = vmatprep.subr.mxu0 0.0
        %407 = vmatpush1.msra.mxu0 0.0
        %408 = vmatprep.subr.mxu0 0.0
        %409 = vmatpush1.msra.mxu0 0.0
        %410 = vmatprep.subr.mxu0 0.0
        %411 = vmatpush1.msra.mxu0 0.0
        %412 = vmatprep.subr.mxu0 0.0
        %413 = vmatpush1.msra.mxu0 0.0
        %414 = vmatprep.subr.mxu0 0.0
        %415 = vmatpush1.msra.mxu0 0.0
        %416 = vmatprep.subr.mxu0 0.0
        %417 = vmatpush1.msra.mxu0 0.0
        %418 = vmatprep.subr.mxu0 0.0
        %419 = vmatpush1.msra.mxu0 0.0
        %420 = vmatprep.subr.mxu0 0.0
        %421 = vmatpush1.msra.mxu0 0.0
        %422 = vmatprep.subr.mxu0 0.0
        %423 = vmatpush1.msra.mxu0 0.0
        %424 = vmatprep.subr.mxu0 0.0
        %425 = vmatpush1.msra.mxu0 0.0
        %426 = vmatprep.subr.mxu0 0.0
        %427 = vmatpush1.msra.mxu0 0.0
        %428 = vmatprep.subr.mxu0 0.0
        %429 = vmatpush1.msra.mxu0 0.0
        %430 = vmatprep.subr.mxu0 0.0
        %431 = vmatpush1.msra.mxu0 0.0
        %432 = vmatprep.subr.mxu0 0.0
        %433 = vmatpush1.msra.mxu0 0.0
        %434 = vmatprep.subr.mxu0 0.0
        %435 = vmatpush1.msra.mxu0 0.0
        %436 = vmatprep.subr.mxu0 0.0
        %437 = vmatpush1.msra.mxu0 0.0
        %438 = vmatprep.subr.mxu0 0.0
        %439 = vmatpush1.msra.mxu0 0.0
        %440 = vmatprep.subr.mxu0 0.0
        %441 = vmatpush1.msra.mxu0 0.0
        %442 = vmatprep.mubr.f32.mxu0 0.0
        %443 = vmatmul.mubr.f32.gmra.mrb[0].mxu0 %v367
        %v444 = vpop.f32.mrb[0].mxu0
        %v445 = vadd.f32 0.0, %v444
        %v446 = vpop.f32.mrb[0].mxu0
        %447 = vmatprep.mubr.f32.mxu0 0.0
        %448 = vmatmul.mubr.f32.gmra.mrb[0].mxu0 %v370
        %v449 = vpop.f32.mrb[0].mxu0
        %v450 = vadd.f32 0.0, %v449
        %v451 = vpop.f32.mrb[0].mxu0
        %452 = vmatprep.mubr.f32.mxu0 0.0
        %453 = vmatmul.mubr.f32.gmra.mrb[0].mxu0 %v373
        %v454 = vpop.f32.mrb[0].mxu0
        %v455 = vadd.f32 0.0, %v454
        %v456 = vpop.f32.mrb[0].mxu0
        %457 = vmatprep.mubr.f32.mxu0 0.0
        %458 = vmatmul.mubr.f32.gmra.mrb[0].mxu0 %v376
        %v459 = vpop.f32.mrb[0].mxu0
        %v460 = vadd.f32 0.0, %v459
        %v461 = vpop.f32.mrb[0].mxu0
        %462 = vdwg.mxu0
        %v465 = vunpack.c.l.s4 1966171168
        %v466 = vunpack.c.0.s8 %v465
        %v467 = vlaneseq
        %v468 = vshrl.u32 %v467, 7
        %v469 = vsub.s32 %v466, %v468
        %v470 = vrot.slane %v365, %v469
        %v471 = vcombine.high %v470, %v470
        %v473 = vunpack.c.l.s4 1966171168
        %v474 = vunpack.c.0.s8 %v473
        %v475 = vlaneseq
        %v476 = vshrl.u32 %v475, 7
        %v477 = vsub.s32 %v474, %v476
        %v478 = vrot.slane %v470, %v477
        %v480 = vunpack.c.l.s4 1966171168
        %v481 = vunpack.c.0.s8 %v480
        %v482 = vlaneseq
        %v483 = vshrl.u32 %v482, 7
        %v484 = vsub.s32 %v481, %v483
        %v485 = vrot.slane %v471, %v484
        %v486 = vlaneseq
        %v487 = vshrl.u32 %v486, 7
        %v488 = vsub.s32 0, %v487
        %v489 = vrot.slane %v478, %v488
        %v490 = vlaneseq
        %v491 = vshrl.u32 %v490, 7
        %v492 = vsub.s32 0, %v491
        %v493 = vrot.slane %v485, %v492
        %v496 = vadd.f32 %v445, %v489
        %v497 = vadd.f32 %v450, %v489
        %v498 = vadd.f32 %v455, %v493
        %v499 = vadd.f32 %v460, %v493
        %500 = vst.msk [vmem:[%s245] sm:$0xff] %vm261, %v496
        %501 = vst.msk [vmem:[%s245 + $0x8] sm:$0xff] %vm261, %v497
        %502 = vst.msk [vmem:[%s245 + $0x10] sm:$0xff] %vm261, %v498
        %503 = vst.msk [vmem:[%s245 + $0x18] sm:$0xff] %vm261, %v499
        %s504 = sand.u32 %s119, 1
        %s505 = scalar_lea.sflag [#allocation4], %s504
        %s506 = sand.u32 %s119, 1
        %s507 = smul.addr %s506, 32
        %s508 = scalar_lea.vmem [#allocation8], %s507
        // Predicated region
        $region49: #{tpu_custom_call.1} parent=35 // pred_check
          %p509 = pneg %p129
        $region50: #{tpu_custom_call.1} parent=35 // pred_check_branch
          %511 = sbr.rel (%p509) target = $region52
        $region51: #{tpu_custom_call.1} parent=35 // pred_region
          %s512 = smul.u32 2, %s22
          %s514 = ssub.s32 512, 512
          %515 = vsyncadd %s505, %s514
          %s516 = smul.addr %s512, 2
          %s517 = smul.addr %s516, 128
          %s518 = scalar_lea.hbm %s4, %s517
          %s519 = sshll.u32 %s508, 4
          %s520 = int_to_ptr.vmem [resolvable:$true] %s519
          %525 = dma.vmem_to_hbm [thread:$0]  %s520, 512, %s518, %s505, 128, 128, 8
        $region52: #{tpu_custom_call.1} parent=35 // pred_fallthru
          _
      $region36: #{tpu_custom_call.1} parent=5 // pred_fallthru
        _
      %p526 = scmp.le.s32.totalorder 2, %s17
      // Predicated region
      $region53: #{tpu_custom_call.1} parent=5 // pred_check
        %p527 = pneg %p526
      $region54: #{tpu_custom_call.1} parent=5 // pred_check_branch
        %529 = sbr.rel (%p527) target = $region56
      $region55: #{tpu_custom_call.1} parent=5 // pred_region
        %s530 = ssub.s32 %s17, 2
        // Predicated region
        $region57: #{tpu_custom_call.1} parent=55 // pred_check
          %p531 = pneg %p135
        $region58: #{tpu_custom_call.1} parent=55 // pred_check_branch
          %533 = sbr.rel (%p531) target = $region60
        $region59: #{tpu_custom_call.1} parent=55 // pred_region
          %s534 = sand.u32 %s120, 1
          %s535 = scalar_lea.sflag [#allocation4], %s534
          %s536 = sand.u32 %s120, 1
          %s537 = smul.addr %s536, 32
          %s538 = scalar_lea.vmem [#allocation8], %s537
          %539 = dma.done %s535, 512
        $region60: #{tpu_custom_call.1} parent=55 // pred_fallthru
          _
      $region56: #{tpu_custom_call.1} parent=5 // pred_fallthru
        _
    $region6: #{tpu_custom_call.1} parent=1 // loop_footer
      %s21 = sadd.s32 1, %s17
    $region7: #{tpu_custom_call.1} parent=1 // loop_footer_branch
      %16 = sbr.rel target = $region3
    $region8: #{tpu_custom_call.1} parent=1 // loop_exit
      _
    %540 = vsyncpa [#allocation3], 1
    %s541 = scalar_lea.sflag [#allocation3], 1
    %542 = vsyncpa %s541, 1
    %543 = vsyncpa [#allocation6], 1
    %544 = vsyncpa [#allocation4], 1
    %s545 = scalar_lea.sflag [#allocation4], 1
    %546 = vsyncpa %s545, 1

</llo_original>
